<compile_context>
chip_gen: v5e
topology: v5e:2x2
jax: 0.10.0
libtpu: 0.0.40
codegen_flags: <defaults>
</compile_context>

<pallas_src>
import math
import functools

import jax
import jax.numpy as jnp
from jax import lax
from jax.experimental import pallas as pl
from jax.experimental.pallas import tpu as pltpu


def _attention_core(q2, k2, v2, o_ref, *, bt, lq, n, d_out):
    """Shared softmax-attention core on already-projected 2D slabs.

    q2: (bt*lq, d_out), k2/v2: (bt*n, d_out), o_ref: (bt*lq, d_out).
    Scale is already folded into q2 (via Wq).
    """
    # Split the leading (sublane) dim back into (batch, rows); lane dim kept.
    qb = q2.reshape(bt, lq, d_out)
    kb = k2.reshape(bt, n, d_out)
    vb = v2.reshape(bt, n, d_out)

    # Scores: batch over bt, contract last dims — no K^T materialization.
    s = lax.dot_general(qb, kb,
                        dimension_numbers=(((2,), (2,)), ((0,), (0,))),
                        preferred_element_type=jnp.float32)      # (bt, lq, n)

    # Softmax over the key axis (PyTorch dim=2), max-subtracted for stability.
    s = s - jnp.max(s, axis=-1, keepdims=True)
    p = jnp.exp(s)
    inv = pl.reciprocal(jnp.sum(p, axis=-1, keepdims=True), approx=True)
    attn = p * inv

    out = lax.dot_general(attn, vb,
                          dimension_numbers=(((2,), (1,)), ((0,), (0,))),
                          preferred_element_type=jnp.float32)    # (bt, lq, d)

    o_ref[...] = out.reshape(bt * lq, d_out).astype(o_ref.dtype)


def _attn_kernel_fused(q_ref, x_ref, wq_ref, wkv_ref, o_ref, *,
                       bt, lq, n, d_out):
    """One grid step = `bt` batch rows; K/V projection fused into one matmul.

    q_ref  : (bt*lq, D)      flattened query rows
    x_ref  : (bt*n,  D)      flattened key/value rows
    wq_ref : (D, d_out)      Wq^T already scaled by 1/sqrt(d_out)
    wkv_ref: (D, 2*d_out)    [Wk^T | Wv^T] concatenated along lanes
    o_ref  : (bt*lq, d_out)  flattened output rows
    """
    q2 = jnp.dot(q_ref[...], wq_ref[...], preferred_element_type=jnp.float32)
    kv2 = jnp.dot(x_ref[...], wkv_ref[...], preferred_element_type=jnp.float32)
    # d_out is a multiple of 128 on this path -> lane-tile-aligned slices.
    k2 = kv2[:, :d_out]
    v2 = kv2[:, d_out:]
    _attention_core(q2, k2, v2, o_ref, bt=bt, lq=lq, n=n, d_out=d_out)


def _attn_kernel_split(q_ref, x_ref, wq_ref, wk_ref, wv_ref, o_ref, *,
                       bt, lq, n, d_out):
    """Fallback path for d_out not a multiple of 128 (no fused K/V slice)."""
    q2 = jnp.dot(q_ref[...], wq_ref[...], preferred_element_type=jnp.float32)
    k2 = jnp.dot(x_ref[...], wk_ref[...], preferred_element_type=jnp.float32)
    v2 = jnp.dot(x_ref[...], wv_ref[...], preferred_element_type=jnp.float32)
    _attention_core(q2, k2, v2, o_ref, bt=bt, lq=lq, n=n, d_out=d_out)


def _default_block_b(B, Lq, N):
    """>=2 grid steps when the sublane block sizes stay multiples of 8."""
    if B % 2 == 0:
        bb = B // 2
        if (bb * Lq) % 8 == 0 and (bb * N) % 8 == 0:
            return bb
    return B


def global_graph_layer(query, x, wq_t, wk_t, wv_t, *, block_b=None):
    """Pallas call for one GlobalGraphLayer.

    query: (B, Lq, D), x: (B, N, D), w*_t: (D, d_out) (in_features x out).
    Returns (B, Lq, d_out).
    """
    B, Lq, D = query.shape
    _, N, _ = x.shape
    d_out = wq_t.shape[1]

    if block_b is None:
        block_b = _default_block_b(B, Lq, N)
    assert B % block_b == 0, (B, block_b)
    grid_b = B // block_b

    # Fold the attention scale into Wq once (host/XLA side, one tiny op).
    wq_scaled = wq_t * (1.0 / math.sqrt(d_out))

    # Present inputs/output as 2D slabs: sublane-dense blocks, contiguous DMA.
    q2d = query.reshape(B * Lq, D)
    x2d = x.reshape(B * N, D)

    fuse_kv = (d_out % 128 == 0)
    if fuse_kv:
        wkv = jnp.concatenate([wk_t, wv_t], axis=1)          # (D, 2*d_out)
        kernel = functools.partial(_attn_kernel_fused, bt=block_b, lq=Lq,
                                   n=N, d_out=d_out)
        weight_args = (wq_scaled, wkv)
        weight_specs = [
            pl.BlockSpec((D, d_out), lambda b: (0, 0)),        # Wq^T * scale
            pl.BlockSpec((D, 2 * d_out), lambda b: (0, 0)),    # [Wk^T|Wv^T]
        ]
    else:
        kernel = functools.partial(_attn_kernel_split, bt=block_b, lq=Lq,
                                   n=N, d_out=d_out)
        weight_args = (wq_scaled, wk_t, wv_t)
        weight_specs = [
            pl.BlockSpec((D, d_out), lambda b: (0, 0)),        # Wq^T * scale
            pl.BlockSpec((D, d_out), lambda b: (0, 0)),        # Wk^T
            pl.BlockSpec((D, d_out), lambda b: (0, 0)),        # Wv^T
        ]

    out2d = pl.pallas_call(
        kernel,
        out_shape=jax.ShapeDtypeStruct((B * Lq, d_out), query.dtype),
        grid_spec=pltpu.PrefetchScalarGridSpec(
            num_scalar_prefetch=0,
            grid=(grid_b,),
            in_specs=[
                pl.BlockSpec((block_b * Lq, D), lambda b: (b, 0)),   # query
                pl.BlockSpec((block_b * N, D), lambda b: (b, 0)),    # x
                *weight_specs,
            ],
            out_specs=pl.BlockSpec((block_b * Lq, d_out), lambda b: (b, 0)),
        ),
        compiler_params=pltpu.CompilerParams(
            dimension_semantics=("parallel",)),
    )(q2d, x2d, *weight_args)

    return out2d.reshape(B, Lq, d_out)


def init_linear_weight(key, out_features, in_features):
    """nn.Linear default init U(-1/sqrt(in), 1/sqrt(in)), returned transposed
    to (in_features, out_features) so the kernel computes y = x @ W."""
    bound = 1.0 / math.sqrt(in_features)
    w = jax.random.uniform(key, (out_features, in_features),
                           minval=-bound, maxval=bound, dtype=jnp.float32)
    return w.T  # (in, out)


def global_graph_net2(x, query_lastn, params):
    """Forward pass of GlobalGraphNet2.

    x: (B, N, D), query_lastn: python int. Returns (B, query_lastn, D).
    """
    # attn1(x, x) is dead code in the reference forward (its output is
    # immediately overwritten by attn2), so it is skipped entirely — the
    # forward result is identical and >50% of the work disappears.
    q2 = x[:, -query_lastn:, :]
    return global_graph_layer(q2, x, *params["attn2"])


def _reference(x, query_lastn, params):
    """Pure-JAX reference mirroring the PyTorch forward exactly."""
    def layer(query, xx, wq_t, wk_t, wv_t):
        Q = query @ wq_t
        K = xx @ wk_t
        V = xx @ wv_t
        d_out = wq_t.shape[1]
        s = jnp.einsum("bqd,bkd->bqk", Q, K) / math.sqrt(d_out)
        attn = jax.nn.softmax(s, axis=2)
        return jnp.einsum("bqk,bkd->bqd", attn, V)

    _ = layer(x, x, *params["attn1"])   # dead in the PyTorch forward too
    return layer(x[:, -query_lastn:, :], x, *params["attn2"])


if __name__ == "__main__":
    # Small shapes consistent with the module (in_features=out_features=128).
    B, N, D = 4, 16, 128         # batch, num_polylines, feature dim
    query_lastn = 8

    key = jax.random.PRNGKey(0)
    kx, k1q, k1k, k1v, k2q, k2k, k2v = jax.random.split(key, 7)

    x = jax.random.normal(kx, (B, N, D), dtype=jnp.float32)

    params = {
        "attn1": (init_linear_weight(k1q, D, D),
                  init_linear_weight(k1k, D, D),
                  init_linear_weight(k1v, D, D)),
        "attn2": (init_linear_weight(k2q, D, D),
                  init_linear_weight(k2k, D, D),
                  init_linear_weight(k2v, D, D)),
    }

    out = global_graph_net2(x, query_lastn, params)
    out = jax.block_until_ready(out)

    ref = _reference(x, query_lastn, params)
    assert out.shape == (B, query_lastn, D), out.shape
    # Tolerance accounts for the EUP approximate reciprocal in the softmax.
    assert jnp.allclose(out, ref, atol=5e-3, rtol=5e-3), (
        float(jnp.max(jnp.abs(out - ref))))

    print("KERNEL_OK")
</pallas_src>

<mosaic_0001>
module attributes {stable_mosaic.version = 11 : i64} {
  func.func @_attn_kernel_fused(%arg0: i32, %arg1: memref<16x128xf32, #tpu.memory_space<vmem>>, %arg2: memref<32x128xf32, #tpu.memory_space<vmem>>, %arg3: memref<128x128xf32, #tpu.memory_space<vmem>>, %arg4: memref<128x256xf32, #tpu.memory_space<vmem>>, %arg5: memref<16x128xf32, #tpu.memory_space<vmem>>) attributes {dimension_semantics = [#tpu.dimension_semantics<parallel>], iteration_bounds = array<i64: 2>, scalar_prefetch = 0 : i64, scratch_operands = 0 : i64, tpu.core_type = #tpu.core_type<tc>, window_params = [{transform_indices = @transform_0, window_bounds = array<i64: 16, 128>}, {transform_indices = @transform_1, window_bounds = array<i64: 32, 128>}, {pipeline_mode = #tpu.pipeline_mode<synchronous>, transform_indices = @transform_2, window_bounds = array<i64: 128, 128>}, {pipeline_mode = #tpu.pipeline_mode<synchronous>, transform_indices = @transform_3, window_bounds = array<i64: 128, 256>}, {transform_indices = @transform_4, window_bounds = array<i64: 16, 128>}]} {
    %c0 = arith.constant 0 : index
    %c0_0 = arith.constant 0 : index
    %0 = vector.load %arg1[%c0, %c0_0] : memref<16x128xf32, #tpu.memory_space<vmem>>, vector<16x128xf32>
    %c0_1 = arith.constant 0 : index
    %c0_2 = arith.constant 0 : index
    %1 = vector.load %arg3[%c0_1, %c0_2] : memref<128x128xf32, #tpu.memory_space<vmem>>, vector<128x128xf32>
    %cst = arith.constant dense<0.000000e+00> : vector<16x128xf32>
    %2 = tpu.matmul %0, %1, %cst {dimension_numbers = #tpu.dot_dimension_numbers<[1], [0], [0], [1], [0, 0, 1, 1], [], []>} : vector<16x128xf32>, vector<128x128xf32>, vector<16x128xf32> -> vector<16x128xf32>
    %c0_3 = arith.constant 0 : index
    %c0_4 = arith.constant 0 : index
    %3 = vector.load %arg2[%c0_3, %c0_4] : memref<32x128xf32, #tpu.memory_space<vmem>>, vector<32x128xf32>
    %c0_5 = arith.constant 0 : index
    %c0_6 = arith.constant 0 : index
    %4 = vector.load %arg4[%c0_5, %c0_6] : memref<128x256xf32, #tpu.memory_space<vmem>>, vector<128x256xf32>
    %cst_7 = arith.constant dense<0.000000e+00> : vector<32x256xf32>
    %5 = tpu.matmul %3, %4, %cst_7 {dimension_numbers = #tpu.dot_dimension_numbers<[1], [0], [0], [1], [0, 0, 1, 1], [], []>} : vector<32x128xf32>, vector<128x256xf32>, vector<32x256xf32> -> vector<32x256xf32>
    %6 = vector.extract_strided_slice %5 {offsets = [0, 0], sizes = [32, 128], strides = [1, 1]} : vector<32x256xf32> to vector<32x128xf32>
    %7 = vector.extract_strided_slice %5 {offsets = [0, 128], sizes = [32, 128], strides = [1, 1]} : vector<32x256xf32> to vector<32x128xf32>
    %8 = vector.shape_cast %2 : vector<16x128xf32> to vector<2x8x128xf32>
    %9 = vector.shape_cast %6 : vector<32x128xf32> to vector<2x16x128xf32>
    %10 = vector.shape_cast %7 : vector<32x128xf32> to vector<2x16x128xf32>
    %cst_8 = arith.constant dense<0.000000e+00> : vector<2x8x16xf32>
    %11 = tpu.matmul %8, %9, %cst_8 {dimension_numbers = #tpu.dot_dimension_numbers<[2], [2], [1], [1], [0, 0, 0, 1, 1, 1], [0], [0]>} : vector<2x8x128xf32>, vector<2x16x128xf32>, vector<2x8x16xf32> -> vector<2x8x16xf32>
    %cst_9 = arith.constant dense<0xFF800000> : vector<2x8xf32>
    %12 = vector.multi_reduction <maximumf>, %11, %cst_9 [2] : vector<2x8x16xf32> to vector<2x8xf32>
    %13 = vector.shape_cast %12 : vector<2x8xf32> to vector<2x8x1xf32>
    %14 = vector.broadcast %13 : vector<2x8x1xf32> to vector<2x8x16xf32>
    %15 = arith.subf %11, %14 : vector<2x8x16xf32>
    %16 = math.exp %15 : vector<2x8x16xf32>
    %cst_10 = arith.constant dense<0.000000e+00> : vector<2x8xf32>
    %17 = vector.multi_reduction <add>, %16, %cst_10 [2] : vector<2x8x16xf32> to vector<2x8xf32>
    %18 = vector.shape_cast %17 : vector<2x8xf32> to vector<2x8x1xf32>
    %19 = tpu.reciprocal %18 {approx = true} : vector<2x8x1xf32> -> vector<2x8x1xf32>
    %20 = vector.broadcast %19 : vector<2x8x1xf32> to vector<2x8x16xf32>
    %21 = arith.mulf %16, %20 : vector<2x8x16xf32>
    %cst_11 = arith.constant dense<0.000000e+00> : vector<2x8x128xf32>
    %22 = tpu.matmul %21, %10, %cst_11 {dimension_numbers = #tpu.dot_dimension_numbers<[2], [1], [1], [2], [0, 0, 0, 1, 1, 2], [0], [0]>} : vector<2x8x16xf32>, vector<2x16x128xf32>, vector<2x8x128xf32> -> vector<2x8x128xf32>
    %23 = vector.shape_cast %22 : vector<2x8x128xf32> to vector<16x128xf32>
    %c0_12 = arith.constant 0 : index
    %c0_13 = arith.constant 0 : index
    %24 = vector.load %arg5[%c0_12, %c0_13] : memref<16x128xf32, #tpu.memory_space<vmem>>, vector<16x128xf32>
    tpu.vector_store %arg5[%c0_12, %c0_13], %23 {strides = array<i32>} : memref<16x128xf32, #tpu.memory_space<vmem>>, vector<16x128xf32>,
    return
  }
  func.func @transform_0(%arg0: i32) -> (i32, i32) {
    %c0_i32 = arith.constant 0 : i32
    %c0_i32_0 = arith.constant 0 : i32
    return %arg0, %c0_i32 : i32, i32
  }
  func.func @transform_1(%arg0: i32) -> (i32, i32) {
    %c0_i32 = arith.constant 0 : i32
    %c0_i32_0 = arith.constant 0 : i32
    return %arg0, %c0_i32 : i32, i32
  }
  func.func @transform_2(%arg0: i32) -> (i32, i32) {
    %c0_i32 = arith.constant 0 : i32
    %c0_i32_0 = arith.constant 0 : i32
    %c0_i32_1 = arith.constant 0 : i32
    return %c0_i32, %c0_i32_0 : i32, i32
  }
  func.func @transform_3(%arg0: i32) -> (i32, i32) {
    %c0_i32 = arith.constant 0 : i32
    %c0_i32_0 = arith.constant 0 : i32
    %c0_i32_1 = arith.constant 0 : i32
    return %c0_i32, %c0_i32_0 : i32, i32
  }
  func.func @transform_4(%arg0: i32) -> (i32, i32) {
    %c0_i32 = arith.constant 0 : i32
    %c0_i32_0 = arith.constant 0 : i32
    return %arg0, %c0_i32 : i32, i32
  }
}

</mosaic_0001>

<llo_original>
// kernel: tpu_custom_call.1
$region0: #{tpu_custom_call.1}
  #allocation0 [shape = 'u32[]', space=smem, size = 0x4, offset = 0x4, fixed_abs, tag = 'smem constant byte address 0x4 - core index']
  #allocation1 [shape = 'u32[72,128]{1,0:T(1,128)}', space=vmem, size = 0x9000, scoped, tag = 'internal scratch']
  %s0 = inlined_call_operand.hbm [shape: f32[32,128], index: 0, kind: input, shape index: {}]
  %s1 = inlined_call_operand.hbm [shape: f32[64,128], index: 1, kind: input, shape index: {}]
  %s2 = inlined_call_operand.hbm [shape: f32[128,128], index: 2, kind: input, shape index: {}]
  %s3 = inlined_call_operand.hbm [shape: f32[128,256], index: 3, kind: input, shape index: {}]
  %s4 = inlined_call_operand.hbm [shape: f32[32,128], index: 4, kind: output, shape index: {}]
  %s5 = sld [smem:[#allocation0]]
  $region65: #{tpu_custom_call.1} parent=0
    _
  %s7 = ssub.s32 1, %s5
  %s8 = scalar_select 0, %s7, %s5
  $region1: #{tpu_custom_call.1} parent=0
    #allocation2 [shape = 'u8[16384]{0}', space=vmem, size = 0x4000, scoped, tag = 'input window, operand 0']
    #allocation3 [shape = 's32[2]{0}', space=sflag, size = 0x8, scoped, tag = 'scoped memory for tpu_custom_call.1']
    #allocation4 [shape = 's32[2]{0}', space=sflag, size = 0x8, scoped, tag = 'scoped memory for tpu_custom_call.1']
    #allocation5 [shape = 'u8[32768]{0}', space=vmem, size = 0x8000, scoped, tag = 'input window, operand 1']
    #allocation6 [shape = 's32[2]{0}', space=sflag, size = 0x8, scoped, tag = 'scoped memory for tpu_custom_call.1']
    #allocation7 [shape = 'u8[65536]{0}', space=vmem, size = 0x10000, scoped, tag = 'input window, operand 2, single buffered']
    #allocation8 [shape = 'u8[131072]{0}', space=vmem, size = 0x20000, scoped, tag = 'input window, operand 3, single buffered']
    #allocation9 [shape = 's32[1]{0}', space=sflag, size = 0x4, scoped, tag = 'scoped memory for tpu_custom_call.1']
    #allocation10 [shape = 'u8[16384]{0}', space=vmem, size = 0x4000, scoped, tag = 'output window, operand 0']
    %9 = vsyncpa [#allocation3], 0
    %s10 = scalar_lea.sflag [#allocation3], 1
    %11 = vsyncpa %s10, 0
    %12 = vsyncpa [#allocation6], 0
    %s13 = scalar_lea.sflag [#allocation6], 1
    %14 = vsyncpa %s13, 0
    %15 = vsyncpa [#allocation9], 0
    %16 = vsyncpa [#allocation4], 0
    %s17 = scalar_lea.sflag [#allocation4], 1
    %18 = vsyncpa %s17, 0
    loop: start=0, step=1, limit=4
    $region2: #{tpu_custom_call.1} parent=1 // loop_pre_header
      _
    $region3: #{tpu_custom_call.1} parent=1 // loop_header
      %s20 = sphi 0, %s24
      %p21 = scmp.ge.s32.totalorder %s20, 4
      %s30 = sphi 0, %s32
      %s33 = sphi 0, %s30
      %s34 = sphi 0, %s33
      %s50 = sphi 0, %s34
      %s56 = sphi 0, %s58
      %s59 = sphi 0, %s56
      %s60 = sphi 0, %s59
      %s76 = sphi 0, %s60
      %s80 = sphi 0, %s80
      %s82 = sphi 0, %s80
      %s83 = sphi 0, %s82
      %s97 = sphi 0, %s83
      %s101 = sphi 0, %s101
      %s103 = sphi 0, %s101
      %s104 = sphi 0, %s103
      %s118 = sphi 0, %s104
      %s124 = sphi 0, %s126
      %s127 = sphi 0, %s124
      %s128 = sphi 0, %s127
      %s144 = sphi 0, %s128
    $region4: #{tpu_custom_call.1} parent=1 // loop_header_branch
      %23 = sbr.rel (%p21) target = $region8
    $region5: #{tpu_custom_call.1} parent=1 // loop_body
      %s25 = ssub.s32 %s20, 1
      %s26 = ssub.s32 %s20, 2
      %s27 = sadd.s32 %s20, 1
      %s28 = ssub.s32 %s20, %s27
      %p29 = scmp.eq.s32.totalorder %s28, 0
      %s31 = sadd.s32 %s30, 1
      %s32 = scalar_select %p29, %s30, %s31
      %p35 = pneg %p29
      %p36 = scmp.eq.s32.totalorder %s20, 1
      %p37 = por %p35, %p36
      %p38 = scmp.ne.s32.totalorder %s30, %s33
      %p39 = scmp.eq.s32.totalorder %s20, 0
      %p40 = por %p38, %p39
      %p41 = scmp.ne.s32.totalorder %s30, %s33
      %p42 = scmp.eq.s32.totalorder %s25, 1
      %p43 = por %p41, %p42
      %p44 = scmp.ne.s32.totalorder %s33, %s34
      %p45 = scmp.eq.s32.totalorder %s25, 0
      %p46 = por %p44, %p45
      %p47 = scmp.ne.s32.totalorder %s33, %s34
      %p48 = scmp.eq.s32.totalorder %s26, 1
      %p49 = por %p47, %p48
      %p51 = scmp.ne.s32.totalorder %s34, %s50
      %p52 = scmp.eq.s32.totalorder %s26, 0
      %p53 = por %p51, %p52
      %s54 = ssub.s32 %s20, %s27
      %p55 = scmp.eq.s32.totalorder %s54, 0
      %s57 = sadd.s32 %s56, 1
      %s58 = scalar_select %p55, %s56, %s57
      %p61 = pneg %p55
      %p62 = scmp.eq.s32.totalorder %s20, 1
      %p63 = por %p61, %p62
      %p64 = scmp.ne.s32.totalorder %s56, %s59
      %p65 = scmp.eq.s32.totalorder %s20, 0
      %p66 = por %p64, %p65
      %p67 = scmp.ne.s32.totalorder %s56, %s59
      %p68 = scmp.eq.s32.totalorder %s25, 1
      %p69 = por %p67, %p68
      %p70 = scmp.ne.s32.totalorder %s59, %s60
      %p71 = scmp.eq.s32.totalorder %s25, 0
      %p72 = por %p70, %p71
      %p73 = scmp.ne.s32.totalorder %s59, %s60
      %p74 = scmp.eq.s32.totalorder %s26, 1
      %p75 = por %p73, %p74
      %p77 = scmp.ne.s32.totalorder %s60, %s76
      %p78 = scmp.eq.s32.totalorder %s26, 0
      %p79 = por %p77, %p78
      %s81 = sadd.s32 %s80, 1
      %p84 = scmp.eq.s32.totalorder %s20, 1
      %p85 = scmp.ne.s32.totalorder %s80, %s82
      %p86 = scmp.eq.s32.totalorder %s20, 0
      %p87 = por %p85, %p86
      %p88 = scmp.ne.s32.totalorder %s80, %s82
      %p89 = scmp.eq.s32.totalorder %s25, 1
      %p90 = por %p88, %p89
      %p91 = scmp.ne.s32.totalorder %s82, %s83
      %p92 = scmp.eq.s32.totalorder %s25, 0
      %p93 = por %p91, %p92
      %p94 = scmp.ne.s32.totalorder %s82, %s83
      %p95 = scmp.eq.s32.totalorder %s26, 1
      %p96 = por %p94, %p95
      %p98 = scmp.ne.s32.totalorder %s83, %s97
      %p99 = scmp.eq.s32.totalorder %s26, 0
      %p100 = por %p98, %p99
      %s102 = sadd.s32 %s101, 1
      %p105 = scmp.eq.s32.totalorder %s20, 1
      %p106 = scmp.ne.s32.totalorder %s101, %s103
      %p107 = scmp.eq.s32.totalorder %s20, 0
      %p108 = por %p106, %p107
      %p109 = scmp.ne.s32.totalorder %s101, %s103
      %p110 = scmp.eq.s32.totalorder %s25, 1
      %p111 = por %p109, %p110
      %p112 = scmp.ne.s32.totalorder %s103, %s104
      %p113 = scmp.eq.s32.totalorder %s25, 0
      %p114 = por %p112, %p113
      %p115 = scmp.ne.s32.totalorder %s103, %s104
      %p116 = scmp.eq.s32.totalorder %s26, 1
      %p117 = por %p115, %p116
      %p119 = scmp.ne.s32.totalorder %s104, %s118
      %p120 = scmp.eq.s32.totalorder %s26, 0
      %p121 = por %p119, %p120
      %s122 = ssub.s32 %s20, %s27
      %p123 = scmp.eq.s32.totalorder %s122, 0
      %s125 = sadd.s32 %s124, 1
      %s126 = scalar_select %p123, %s124, %s125
      %p129 = pneg %p123
      %p130 = scmp.eq.s32.totalorder %s20, 1
      %p131 = por %p129, %p130
      %p132 = scmp.ne.s32.totalorder %s124, %s127
      %p133 = scmp.eq.s32.totalorder %s20, 0
      %p134 = por %p132, %p133
      %p135 = scmp.ne.s32.totalorder %s124, %s127
      %p136 = scmp.eq.s32.totalorder %s25, 1
      %p137 = por %p135, %p136
      %p138 = scmp.ne.s32.totalorder %s127, %s128
      %p139 = scmp.eq.s32.totalorder %s25, 0
      %p140 = por %p138, %p139
      %p141 = scmp.ne.s32.totalorder %s127, %s128
      %p142 = scmp.eq.s32.totalorder %s26, 1
      %p143 = por %p141, %p142
      %p145 = scmp.ne.s32.totalorder %s128, %s144
      %p146 = scmp.eq.s32.totalorder %s26, 0
      %p147 = por %p145, %p146
      %p148 = scmp.le.s32.totalorder 1, %s20
      %p149 = scmp.lt.s32.totalorder %s20, 3
      %p150 = pnand %p148, %p149
      %p151 = pneg %p150
      // Predicated region
      $region9: #{tpu_custom_call.1} parent=5 // pred_check
        _
      $region10: #{tpu_custom_call.1} parent=5 // pred_check_branch
        %153 = sbr.rel (%p150) target = $region12
      $region11: #{tpu_custom_call.1} parent=5 // pred_region
        %s154 = ssub.s32 %s20, 1
        // Predicated region
        $region13: #{tpu_custom_call.1} parent=11 // pred_check
          %p155 = pneg %p93
        $region14: #{tpu_custom_call.1} parent=11 // pred_check_branch
          %157 = sbr.rel (%p155) target = $region16
        $region15: #{tpu_custom_call.1} parent=11 // pred_region
          %159 = vsyncadd [#allocation6], 0
          %s160 = sshll.u32 %s2, 4
          %s161 = int_to_ptr.hbm [resolvable:$true] %s160
          %s162 = sshll.u32 [#allocation7], 4
          %s163 = int_to_ptr.vmem [resolvable:$true] %s162
          %168 = dma.hbm_to_vmem [thread:$0]  %s161, 2048, %s163, [#allocation6], 128, 128, 8
        $region16: #{tpu_custom_call.1} parent=11 // pred_fallthru
          _
        // Predicated region
        $region17: #{tpu_custom_call.1} parent=11 // pred_check
          %p169 = pneg %p114
        $region18: #{tpu_custom_call.1} parent=11 // pred_check_branch
          %171 = sbr.rel (%p169) target = $region20
        $region19: #{tpu_custom_call.1} parent=11 // pred_region
          %173 = vsyncadd [#allocation9], 0
          %s174 = sshll.u32 %s3, 4
          %s175 = int_to_ptr.hbm [resolvable:$true] %s174
          %s176 = sshll.u32 [#allocation8], 4
          %s177 = int_to_ptr.vmem [resolvable:$true] %s176
          %182 = dma.hbm_to_vmem [thread:$0]  %s175, 4096, %s177, [#allocation9], 256, 256, 16
        $region20: #{tpu_custom_call.1} parent=11 // pred_fallthru
          _
      $region12: #{tpu_custom_call.1} parent=5 // pred_fallthru
        _
      %p183 = scmp.lt.s32.totalorder %s20, 2
      // Predicated region
      $region21: #{tpu_custom_call.1} parent=5 // pred_check
        %p184 = pneg %p183
      $region22: #{tpu_custom_call.1} parent=5 // pred_check_branch
        %186 = sbr.rel (%p184) target = $region24
      $region23: #{tpu_custom_call.1} parent=5 // pred_region
        // Predicated region
        $region25: #{tpu_custom_call.1} parent=23 // pred_check
          %p187 = pneg %p40
        $region26: #{tpu_custom_call.1} parent=23 // pred_check_branch
          %189 = sbr.rel (%p187) target = $region28
        $region27: #{tpu_custom_call.1} parent=23 // pred_region
          %s190 = sand.u32 %s30, 1
          %s191 = scalar_lea.sflag [#allocation3], %s190
          %s192 = sand.u32 %s30, 1
          %s193 = smul.addr %s192, 16
          %s194 = scalar_lea.vmem [#allocation2], %s193
          %s195 = smul.u32 2, %s20
          %197 = vsyncadd %s191, 0
          %s198 = smul.addr %s195, 8
          %s199 = scalar_lea.hbm %s0, %s198
          %s200 = sshll.u32 %s199, 4
          %s201 = int_to_ptr.hbm [resolvable:$true] %s200
          %s202 = sshll.u32 %s194, 4
          %s203 = int_to_ptr.vmem [resolvable:$true] %s202
          %208 = dma.hbm_to_vmem [thread:$0]  %s201, 256, %s203, %s191, 128, 128, 8
        $region28: #{tpu_custom_call.1} parent=23 // pred_fallthru
          _
        // Predicated region
        $region29: #{tpu_custom_call.1} parent=23 // pred_check
          %p209 = pneg %p66
        $region30: #{tpu_custom_call.1} parent=23 // pred_check_branch
          %211 = sbr.rel (%p209) target = $region32
        $region31: #{tpu_custom_call.1} parent=23 // pred_region
          %s212 = sand.u32 %s20, 1
          %s213 = scalar_lea.sflag [#allocation6], %s212
          %s214 = sand.u32 %s56, 1
          %s215 = smul.addr %s214, 32
          %s216 = scalar_lea.vmem [#allocation5], %s215
          %s217 = smul.u32 4, %s20
          %219 = vsyncadd %s213, 0
          %s220 = smul.addr %s217, 8
          %s221 = scalar_lea.hbm %s1, %s220
          %s222 = sshll.u32 %s221, 4
          %s223 = int_to_ptr.hbm [resolvable:$true] %s222
          %s224 = sshll.u32 %s216, 4
          %s225 = int_to_ptr.vmem [resolvable:$true] %s224
          %230 = dma.hbm_to_vmem [thread:$0]  %s223, 512, %s225, %s213, 128, 128, 8
        $region32: #{tpu_custom_call.1} parent=23 // pred_fallthru
          _
      $region24: #{tpu_custom_call.1} parent=5 // pred_fallthru
        _
      %p231 = scmp.le.s32.totalorder 1, %s20
      %p232 = scmp.lt.s32.totalorder %s20, 3
      %p233 = pnand %p231, %p232
      %p234 = pneg %p233
      // Predicated region
      $region33: #{tpu_custom_call.1} parent=5 // pred_check
        _
      $region34: #{tpu_custom_call.1} parent=5 // pred_check_branch
        %236 = sbr.rel (%p233) target = $region36
      $region35: #{tpu_custom_call.1} parent=5 // pred_region
        %s237 = ssub.s32 %s20, 1
        %s238 = sand.u32 %s33, 1
        %s239 = scalar_lea.sflag [#allocation3], %s238
        %s240 = sand.u32 %s33, 1
        %s241 = smul.addr %s240, 16
        %s242 = scalar_lea.vmem [#allocation2], %s241
        // Predicated region
        $region37: #{tpu_custom_call.1} parent=35 // pred_check
          %p243 = pneg %p46
        $region38: #{tpu_custom_call.1} parent=35 // pred_check_branch
          %245 = sbr.rel (%p243) target = $region40
        $region39: #{tpu_custom_call.1} parent=35 // pred_region
          %247 = dma.done %s239, 256
        $region40: #{tpu_custom_call.1} parent=35 // pred_fallthru
          _
        %s248 = sand.u32 %s25, 1
        %s249 = scalar_lea.sflag [#allocation6], %s248
        %s250 = sand.u32 %s59, 1
        %s251 = smul.addr %s250, 32
        %s252 = scalar_lea.vmem [#allocation5], %s251
        // Predicated region
        $region41: #{tpu_custom_call.1} parent=35 // pred_check
          %p253 = pneg %p72
        $region42: #{tpu_custom_call.1} parent=35 // pred_check_branch
          %255 = sbr.rel (%p253) target = $region44
        $region43: #{tpu_custom_call.1} parent=35 // pred_region
          %257 = dma.done %s249, 512
        $region44: #{tpu_custom_call.1} parent=35 // pred_fallthru
          _
        // Predicated region
        $region45: #{tpu_custom_call.1} parent=35 // pred_check
          %p258 = pneg %p93
        $region46: #{tpu_custom_call.1} parent=35 // pred_check_branch
          %260 = sbr.rel (%p258) target = $region48
        $region47: #{tpu_custom_call.1} parent=35 // pred_region
          %262 = dma.done [#allocation6], 2048
        $region48: #{tpu_custom_call.1} parent=35 // pred_fallthru
          _
        // Predicated region
        $region49: #{tpu_custom_call.1} parent=35 // pred_check
          %p263 = pneg %p114
        $region50: #{tpu_custom_call.1} parent=35 // pred_check_branch
          %265 = sbr.rel (%p263) target = $region52
        $region51: #{tpu_custom_call.1} parent=35 // pred_region
          %267 = dma.done [#allocation9], 4096
        $region52: #{tpu_custom_call.1} parent=35 // pred_fallthru
          _
        %s268 = sand.u32 %s33, 1
        %s269 = scalar_lea.sflag [#allocation3], %s268
        %s270 = sand.u32 %s33, 1
        %s271 = smul.addr %s270, 16
        %s272 = scalar_lea.vmem [#allocation2], %s271
        %p273 = pneg %p46
        %p274 = pneg %p43
        %s275 = sand.u32 %s25, 1
        %s276 = scalar_lea.sflag [#allocation6], %s275
        %s277 = sand.u32 %s59, 1
        %s278 = smul.addr %s277, 32
        %s279 = scalar_lea.vmem [#allocation5], %s278
        %p280 = pneg %p72
        %p281 = pneg %p69
        %p282 = pneg %p93
        %p283 = pneg %p90
        %p284 = pneg %p114
        %p285 = pneg %p111
        %p286 = pneg %p140
        %p287 = pneg %p137
        %s288 = sand.u32 %s127, 1
        %s289 = scalar_lea.sflag [#allocation4], %s288
        %s290 = sand.u32 %s127, 1
        %s291 = smul.addr %s290, 16
        %s292 = scalar_lea.vmem [#allocation10], %s291
        %s293 = smul.u32 2, %s25
        %s294 = smul.u32 4, %s25
        %s295 = smul.u32 2, %s25
        %v296 = vld [vmem:[%s242] sm:$0xff]
        %v297 = vld [vmem:[%s242 + $0x8] sm:$0xff]
        %v298 = vld [vmem:[#allocation7] sm:$0xff]
        %v299 = vld [vmem:[#allocation7 + $0x8] sm:$0xff]
        %v300 = vld [vmem:[#allocation7 + $0x10] sm:$0xff]
        %v301 = vld [vmem:[#allocation7 + $0x18] sm:$0xff]
        %v302 = vld [vmem:[#allocation7 + $0x20] sm:$0xff]
        %v303 = vld [vmem:[#allocation7 + $0x28] sm:$0xff]
        %v304 = vld [vmem:[#allocation7 + $0x30] sm:$0xff]
        %v305 = vld [vmem:[#allocation7 + $0x38] sm:$0xff]
        %v306 = vld [vmem:[#allocation7 + $0x40] sm:$0xff]
        %v307 = vld [vmem:[#allocation7 + $0x48] sm:$0xff]
        %v308 = vld [vmem:[#allocation7 + $0x50] sm:$0xff]
        %v309 = vld [vmem:[#allocation7 + $0x58] sm:$0xff]
        %v310 = vld [vmem:[#allocation7 + $0x60] sm:$0xff]
        %v311 = vld [vmem:[#allocation7 + $0x68] sm:$0xff]
        %v312 = vld [vmem:[#allocation7 + $0x70] sm:$0xff]
        %v313 = vld [vmem:[#allocation7 + $0x78] sm:$0xff]
        %314 = vmatpush.msra.mxu0 %v313
        %315 = vmatpush.msra.mxu0 %v312
        %316 = vmatpush.msra.mxu0 %v311
        %317 = vmatpush.msra.mxu0 %v310
        %318 = vmatpush.msra.mxu0 %v309
        %319 = vmatpush.msra.mxu0 %v308
        %320 = vmatpush.msra.mxu0 %v307
        %321 = vmatpush.msra.mxu0 %v306
        %322 = vmatpush.msra.mxu0 %v305
        %323 = vmatpush.msra.mxu0 %v304
        %324 = vmatpush.msra.mxu0 %v303
        %325 = vmatpush.msra.mxu0 %v302
        %326 = vmatpush.msra.mxu0 %v301
        %327 = vmatpush.msra.mxu0 %v300
        %328 = vmatpush.msra.mxu0 %v299
        %329 = vmatpush.msra.mxu0 %v298
        %330 = vmatmul.f32.gmra.mxu0 %v296
        %v331 = vpop.f32.mrf.mxu0
        %v332 = vadd.f32 0.0, %v331
        %333 = vmatmul.f32.gmra.mxu0 %v297
        %v334 = vpop.f32.mrf.mxu0
        %v335 = vadd.f32 0.0, %v334
        %336 = vdwg.mxu0
        %v337 = vld [vmem:[%s252] sm:$0xff]
        %v338 = vld [vmem:[%s252 + $0x8] sm:$0xff]
        %v339 = vld [vmem:[%s252 + $0x10] sm:$0xff]
        %v340 = vld [vmem:[%s252 + $0x18] sm:$0xff]
        %v341 = vld [vmem:[#allocation8] sm:$0xff]
        %v342 = vld [vmem:[#allocation8 + $0x8] sm:$0xff]
        %v343 = vld [vmem:[#allocation8 + $0x10] sm:$0xff]
        %v344 = vld [vmem:[#allocation8 + $0x18] sm:$0xff]
        %v345 = vld [vmem:[#allocation8 + $0x20] sm:$0xff]
        %v346 = vld [vmem:[#allocation8 + $0x28] sm:$0xff]
        %v347 = vld [vmem:[#allocation8 + $0x30] sm:$0xff]
        %v348 = vld [vmem:[#allocation8 + $0x38] sm:$0xff]
        %v349 = vld [vmem:[#allocation8 + $0x40] sm:$0xff]
        %v350 = vld [vmem:[#allocation8 + $0x48] sm:$0xff]
        %v351 = vld [vmem:[#allocation8 + $0x50] sm:$0xff]
        %v352 = vld [vmem:[#allocation8 + $0x58] sm:$0xff]
        %v353 = vld [vmem:[#allocation8 + $0x60] sm:$0xff]
        %v354 = vld [vmem:[#allocation8 + $0x68] sm:$0xff]
        %v355 = vld [vmem:[#allocation8 + $0x70] sm:$0xff]
        %v356 = vld [vmem:[#allocation8 + $0x78] sm:$0xff]
        %v357 = vld [vmem:[#allocation8 + $0x80] sm:$0xff]
        %v358 = vld [vmem:[#allocation8 + $0x88] sm:$0xff]
        %v359 = vld [vmem:[#allocation8 + $0x90] sm:$0xff]
        %v360 = vld [vmem:[#allocation8 + $0x98] sm:$0xff]
        %v361 = vld [vmem:[#allocation8 + $0xa0] sm:$0xff]
        %v362 = vld [vmem:[#allocation8 + $0xa8] sm:$0xff]
        %v363 = vld [vmem:[#allocation8 + $0xb0] sm:$0xff]
        %v364 = vld [vmem:[#allocation8 + $0xb8] sm:$0xff]
        %v365 = vld [vmem:[#allocation8 + $0xc0] sm:$0xff]
        %v366 = vld [vmem:[#allocation8 + $0xc8] sm:$0xff]
        %v367 = vld [vmem:[#allocation8 + $0xd0] sm:$0xff]
        %v368 = vld [vmem:[#allocation8 + $0xd8] sm:$0xff]
        %v369 = vld [vmem:[#allocation8 + $0xe0] sm:$0xff]
        %v370 = vld [vmem:[#allocation8 + $0xe8] sm:$0xff]
        %v371 = vld [vmem:[#allocation8 + $0xf0] sm:$0xff]
        %v372 = vld [vmem:[#allocation8 + $0xf8] sm:$0xff]
        %373 = vmatpush.msra.mxu0 %v371
        %374 = vmatpush.msra.mxu0 %v369
        %375 = vmatpush.msra.mxu0 %v367
        %376 = vmatpush.msra.mxu0 %v365
        %377 = vmatpush.msra.mxu0 %v363
        %378 = vmatpush.msra.mxu0 %v361
        %379 = vmatpush.msra.mxu0 %v359
        %380 = vmatpush.msra.mxu0 %v357
        %381 = vmatpush.msra.mxu0 %v355
        %382 = vmatpush.msra.mxu0 %v353
        %383 = vmatpush.msra.mxu0 %v351
        %384 = vmatpush.msra.mxu0 %v349
        %385 = vmatpush.msra.mxu0 %v347
        %386 = vmatpush.msra.mxu0 %v345
        %387 = vmatpush.msra.mxu0 %v343
        %388 = vmatpush.msra.mxu0 %v341
        %389 = vmatmul.f32.gmra.mxu0 %v337
        %v390 = vpop.f32.mrf.mxu0
        %v391 = vadd.f32 0.0, %v390
        %392 = vmatmul.f32.gmra.mxu0 %v338
        %v393 = vpop.f32.mrf.mxu0
        %v394 = vadd.f32 0.0, %v393
        %395 = vmatmul.f32.gmra.mxu0 %v339
        %v396 = vpop.f32.mrf.mxu0
        %v397 = vadd.f32 0.0, %v396
        %398 = vmatmul.f32.gmra.mxu0 %v340
        %v399 = vpop.f32.mrf.mxu0
        %v400 = vadd.f32 0.0, %v399
        %401 = vdwg.mxu0
        %402 = vmatpush.msra.mxu0 %v372
        %403 = vmatpush.msra.mxu0 %v370
        %404 = vmatpush.msra.mxu0 %v368
        %405 = vmatpush.msra.mxu0 %v366
        %406 = vmatpush.msra.mxu0 %v364
        %407 = vmatpush.msra.mxu0 %v362
        %408 = vmatpush.msra.mxu0 %v360
        %409 = vmatpush.msra.mxu0 %v358
        %410 = vmatpush.msra.mxu0 %v356
        %411 = vmatpush.msra.mxu0 %v354
        %412 = vmatpush.msra.mxu0 %v352
        %413 = vmatpush.msra.mxu0 %v350
        %414 = vmatpush.msra.mxu0 %v348
        %415 = vmatpush.msra.mxu0 %v346
        %416 = vmatpush.msra.mxu0 %v344
        %417 = vmatpush.msra.mxu0 %v342
        %418 = vmatmul.f32.gmra.mxu0 %v337
        %v419 = vpop.f32.mrf.mxu0
        %v420 = vadd.f32 0.0, %v419
        %421 = vmatmul.f32.gmra.mxu0 %v338
        %v422 = vpop.f32.mrf.mxu0
        %v423 = vadd.f32 0.0, %v422
        %424 = vmatmul.f32.gmra.mxu0 %v339
        %v425 = vpop.f32.mrf.mxu0
        %v426 = vadd.f32 0.0, %v425
        %427 = vmatmul.f32.gmra.mxu0 %v340
        %v428 = vpop.f32.mrf.mxu0
        %v429 = vadd.f32 0.0, %v428
        %430 = vdwg.mxu0
        %431 = vmatpush.xpose.msra.mxu0 0.0
        %432 = vmatpush.xpose.msra.mxu0 0.0
        %433 = vmatpush.xpose.msra.mxu0 0.0
        %434 = vmatpush.xpose.msra.mxu0 0.0
        %435 = vmatpush.xpose.msra.mxu0 0.0
        %436 = vmatpush.xpose.msra.mxu0 0.0
        %437 = vmatpush.xpose.msra.mxu0 0.0
        %438 = vmatpush.xpose.msra.mxu0 0.0
        %439 = vmatpush.xpose.msra.mxu0 0.0
        %440 = vmatpush.xpose.msra.mxu0 0.0
        %441 = vmatpush.xpose.msra.mxu0 0.0
        %442 = vmatpush.xpose.msra.mxu0 0.0
        %443 = vmatpush.xpose.msra.mxu0 0.0
        %444 = vmatpush.xpose.msra.mxu0 0.0
        %445 = vmatpush.xpose.msra.mxu0 %v394
        %446 = vmatpush.xpose.msra.mxu0 %v391
        %447 = vmatmul.f32.gmra.mxu0 %v332
        %v448 = vpop.f32.mrf.mxu0
        %v449 = vadd.f32 0.0, %v448
        %450 = vdwg.mxu0
        %451 = vmatpush.xpose.msra.mxu0 0.0
        %452 = vmatpush.xpose.msra.mxu0 0.0
        %453 = vmatpush.xpose.msra.mxu0 0.0
        %454 = vmatpush.xpose.msra.mxu0 0.0
        %455 = vmatpush.xpose.msra.mxu0 0.0
        %456 = vmatpush.xpose.msra.mxu0 0.0
        %457 = vmatpush.xpose.msra.mxu0 0.0
        %458 = vmatpush.xpose.msra.mxu0 0.0
        %459 = vmatpush.xpose.msra.mxu0 0.0
        %460 = vmatpush.xpose.msra.mxu0 0.0
        %461 = vmatpush.xpose.msra.mxu0 0.0
        %462 = vmatpush.xpose.msra.mxu0 0.0
        %463 = vmatpush.xpose.msra.mxu0 0.0
        %464 = vmatpush.xpose.msra.mxu0 0.0
        %465 = vmatpush.xpose.msra.mxu0 %v400
        %466 = vmatpush.xpose.msra.mxu0 %v397
        %467 = vmatmul.f32.gmra.mxu0 %v335
        %v468 = vpop.f32.mrf.mxu0
        %v469 = vadd.f32 0.0, %v468
        %470 = vdwg.mxu0
        %vm471 = vcmask 130048
        %v472 = vsel %vm471, %v449, -inf
        %473 = vmax.xlane.f32.xlu0 %v472
        %v474 = vpop.xlane.xlu0 %473
        %v475 = vsel %vm471, %v469, -inf
        %476 = vmax.xlane.f32.xlu0 %v475
        %v477 = vpop.xlane.xlu0 %476
        %v478 = vsub.f32 %v449, %v474
        %v479 = vsub.f32 %v469, %v477
        %v480 = vmul.f32 %v478, 1.442695
        %v481 = vpow.pop %v480
        %v482 = vmul.f32 %v479, 1.442695
        %v483 = vpow.pop %v482
        %v484 = vsel %vm471, %v481, 0.0
        %485 = vadd.xlane.f32.xlu0 %v484
        %v486 = vpop.xlane.xlu0 %485
        %v487 = vsel %vm471, %v483, 0.0
        %488 = vadd.xlane.f32.xlu0 %v487
        %v489 = vpop.xlane.xlu0 %488
        %v490 = vrcp.pop %v486
        %v491 = vrcp.pop %v489
        %v492 = vmul.f32 %v481, %v490
        %v493 = vmul.f32 %v483, %v491
        %v495 = vsel %vm471, %v492, 0
        %497 = vmatpush.msra.mxu0 0.0
        %498 = vmatpush.msra.mxu0 0.0
        %499 = vmatpush.msra.mxu0 0.0
        %500 = vmatpush.msra.mxu0 0.0
        %501 = vmatpush.msra.mxu0 0.0
        %502 = vmatpush.msra.mxu0 0.0
        %503 = vmatpush.msra.mxu0 0.0
        %504 = vmatpush.msra.mxu0 0.0
        %505 = vmatpush.msra.mxu0 0.0
        %506 = vmatpush.msra.mxu0 0.0
        %507 = vmatpush.msra.mxu0 0.0
        %508 = vmatpush.msra.mxu0 0.0
        %509 = vmatpush.msra.mxu0 0.0
        %510 = vmatpush.msra.mxu0 0.0
        %511 = vmatpush.msra.mxu0 %v423
        %512 = vmatpush.msra.mxu0 %v420
        %513 = vmatmul.f32.gmra.mxu0 %v495
        %v514 = vpop.f32.mrf.mxu0
        %v515 = vadd.f32 0.0, %v514
        %516 = vdwg.mxu0
        %v518 = vsel %vm471, %v493, 0
        %520 = vmatpush.msra.mxu0 0.0
        %521 = vmatpush.msra.mxu0 0.0
        %522 = vmatpush.msra.mxu0 0.0
        %523 = vmatpush.msra.mxu0 0.0
        %524 = vmatpush.msra.mxu0 0.0
        %525 = vmatpush.msra.mxu0 0.0
        %526 = vmatpush.msra.mxu0 0.0
        %527 = vmatpush.msra.mxu0 0.0
        %528 = vmatpush.msra.mxu0 0.0
        %529 = vmatpush.msra.mxu0 0.0
        %530 = vmatpush.msra.mxu0 0.0
        %531 = vmatpush.msra.mxu0 0.0
        %532 = vmatpush.msra.mxu0 0.0
        %533 = vmatpush.msra.mxu0 0.0
        %534 = vmatpush.msra.mxu0 %v429
        %535 = vmatpush.msra.mxu0 %v426
        %536 = vmatmul.f32.gmra.mxu0 %v518
        %v537 = vpop.f32.mrf.mxu0
        %v538 = vadd.f32 0.0, %v537
        %539 = vdwg.mxu0
        %540 = vst [vmem:[%s292] sm:$0xff] %v515
        %541 = vst [vmem:[%s292 + $0x8] sm:$0xff] %v538
        %s542 = sand.u32 %s127, 1
        %s543 = scalar_lea.sflag [#allocation4], %s542
        %s544 = sand.u32 %s127, 1
        %s545 = smul.addr %s544, 16
        %s546 = scalar_lea.vmem [#allocation10], %s545
        // Predicated region
        $region53: #{tpu_custom_call.1} parent=35 // pred_check
          %p547 = pneg %p137
        $region54: #{tpu_custom_call.1} parent=35 // pred_check_branch
          %549 = sbr.rel (%p547) target = $region56
        $region55: #{tpu_custom_call.1} parent=35 // pred_region
          %s550 = smul.u32 2, %s25
          %552 = vsyncadd %s543, 0
          %s553 = smul.addr %s550, 8
          %s554 = scalar_lea.hbm %s4, %s553
          %s555 = sshll.u32 %s546, 4
          %s556 = int_to_ptr.vmem [resolvable:$true] %s555
          %s557 = sshll.u32 %s554, 4
          %s558 = int_to_ptr.hbm [resolvable:$true] %s557
          %563 = dma.vmem_to_hbm [thread:$0]  %s556, 256, %s558, %s543, 128, 128, 8
        $region56: #{tpu_custom_call.1} parent=35 // pred_fallthru
          _
      $region36: #{tpu_custom_call.1} parent=5 // pred_fallthru
        _
      %p564 = scmp.le.s32.totalorder 2, %s20
      // Predicated region
      $region57: #{tpu_custom_call.1} parent=5 // pred_check
        %p565 = pneg %p564
      $region58: #{tpu_custom_call.1} parent=5 // pred_check_branch
        %567 = sbr.rel (%p565) target = $region60
      $region59: #{tpu_custom_call.1} parent=5 // pred_region
        %s568 = ssub.s32 %s20, 2
        // Predicated region
        $region61: #{tpu_custom_call.1} parent=59 // pred_check
          %p569 = pneg %p143
        $region62: #{tpu_custom_call.1} parent=59 // pred_check_branch
          %571 = sbr.rel (%p569) target = $region64
        $region63: #{tpu_custom_call.1} parent=59 // pred_region
          %s572 = sand.u32 %s128, 1
          %s573 = scalar_lea.sflag [#allocation4], %s572
          %s574 = sand.u32 %s128, 1
          %s575 = smul.addr %s574, 16
          %s576 = scalar_lea.vmem [#allocation10], %s575
          %578 = dma.done %s573, 256
        $region64: #{tpu_custom_call.1} parent=59 // pred_fallthru
          _
      $region60: #{tpu_custom_call.1} parent=5 // pred_fallthru
        _
    $region6: #{tpu_custom_call.1} parent=1 // loop_footer
      %s24 = sadd.s32 1, %s20
    $region7: #{tpu_custom_call.1} parent=1 // loop_footer_branch
      %19 = sbr.rel target = $region3
    $region8: #{tpu_custom_call.1} parent=1 // loop_exit
      _
    %579 = vsyncpa [#allocation3], 1
    %s580 = scalar_lea.sflag [#allocation3], 1
    %581 = vsyncpa %s580, 1
    %582 = vsyncpa [#allocation6], 1
    %s583 = scalar_lea.sflag [#allocation6], 1
    %584 = vsyncpa %s583, 1
    %585 = vsyncpa [#allocation9], 1
    %586 = vsyncpa [#allocation4], 1
    %s587 = scalar_lea.sflag [#allocation4], 1
    %588 = vsyncpa %s587, 1

</llo_original>
